<compile_context>
chip_gen: v7x
topology: tpu7x:2x2x1
jax: 0.10.0
libtpu: 0.0.40
codegen_flags: <defaults>
</compile_context>

<pallas_src>
import functools

import jax
import jax.numpy as jnp
import numpy as np
from jax.experimental import pallas as pl
from jax.experimental.pallas import tpu as pltpu

_ALIGN = 32  # row-tile sublane alignment (covers f32 / bf16 / int8 packing)


def _round_up(x, m):
    return ((x + m - 1) // m) * m


def _vmem_budget():
    """Return (per-step input-copy budget, vmem_limit_bytes) per TPU generation."""
    vmem_cap = None
    try:
        vmem_cap = int(pltpu.get_tpu_info().vmem_capacity_bytes)
    except Exception:
        vmem_cap = None
    if not vmem_cap or vmem_cap <= 0:
        vmem_cap = 64 * 1024 * 1024  # v7x per-TensorCore floor; safe everywhere
    if vmem_cap >= 128 * 1024 * 1024:
        # v5e / v6e: 128 MiB physical VMEM -> big streaming tiles.
        return 24 * 1024 * 1024, 96 * 1024 * 1024
    # v7x: 64 MiB per TensorCore, and each TC holds its own double buffers.
    return 14 * 1024 * 1024, 44 * 1024 * 1024


def _knn_focal_kernel(logits_ref, knn_ref, tgt_ref, out_ref, *,
                      gamma, total_n, row_tile):
    i = pl.program_id(0)

    logits = logits_ref[...].astype(jnp.float32)          # (TN, C)
    knn = knn_ref[...].astype(jnp.float32)                # (TN, C)
    tgt = tgt_ref[...]                                     # (TN, 1) int32

    tn, c = logits.shape

    # Row validity: the ragged last block reads past the array edge; those
    # rows hold unspecified data and are removed with a SELECT (jnp.where),
    # not a 0-multiply, so inf/NaN can never leak into the partial sum.
    row_ids = i * row_tile + jax.lax.broadcasted_iota(jnp.int32, (tn, 1), 0)
    valid = row_ids < total_n                              # (TN, 1) bool

    # In-kernel "one-hot": class id == target id (no [N, C] one-hot in HBM).
    class_ids = jax.lax.broadcasted_iota(jnp.int32, (tn, c), 1)
    onehot = class_ids == tgt                              # (TN, C) bool

    # --- per-row cross entropy: logsumexp(logits) - logits[target] ---
    m = jnp.max(logits, axis=-1, keepdims=True)
    lse = jnp.log(jnp.sum(jnp.exp(logits - m), axis=-1, keepdims=True)) + m
    logit_t = jnp.sum(jnp.where(onehot, logits, 0.0), axis=-1, keepdims=True)
    ce = lse - logit_t                                      # (TN, 1)

    # --- kNN probability of the true class (per-row scalar divide only) ---
    knn_sum = jnp.sum(knn, axis=-1, keepdims=True)          # (TN, 1)
    knn_sum = jnp.where(valid, knn_sum, 1.0)                # garbage tail rows -> finite
    knn_t = jnp.sum(jnp.where(onehot, knn, 0.0), axis=-1, keepdims=True)
    p_t = knn_t / knn_sum                                   # (TN, 1)

    # Focal-like modulator; matches PyTorch's exp(gamma * log1p(-p_t)) exactly
    # (including its NaN behaviour for p_t == 1 with gamma == 0).
    modulator = jnp.exp(gamma * jnp.log1p(-p_t))            # (TN, 1)

    contrib = jnp.where(valid, ce * modulator, 0.0)         # (TN, 1)
    partial = jnp.sum(contrib, axis=0, keepdims=True)       # (1, 1)
    out_ref[...] = jnp.broadcast_to(partial.reshape(1, 1, 1), (1, 1, 128))


def knn_focal_like_loss(pred_logits, knn_logits, targets, coeff, *,
                        row_tile=None):
    """Pallas implementation of knnFocalLikeLoss.forward.

    pred_logits: [N, C] float (f32 or bf16)
    knn_logits:  [N, C] float, non-negative scores per class
    targets:     [N]    integer class indices
    coeff:       python float (gamma)
    returns scalar float32 loss.
    """
    n, c = pred_logits.shape
    per_buffer_budget, vmem_limit = _vmem_budget()

    # --- choose a big, VMEM-safe row tile (inputs are double-buffered) ---
    if row_tile is None:
        itemsize = max(jnp.dtype(pred_logits.dtype).itemsize,
                       jnp.dtype(knn_logits.dtype).itemsize)
        # Real VMEM footprint per row of ONE pipelined copy of all inputs:
        # every block's last dim is lane-padded to a multiple of 128, so the
        # int32 (TN, 1) target tile costs 512 B/row, and a small-C logits
        # tile costs round_up(C, 128) * itemsize B/row.
        vmem_bytes_per_row = 2 * _round_up(c, 128) * itemsize + 128 * 4
        row_tile = per_buffer_budget // max(vmem_bytes_per_row, 1)
        # Keep >= 4 grid steps when the problem is big enough: lets the v7x
        # megacore shard the "parallel" axis across both TensorCores and
        # keeps the DMA pipeline warm on every generation.
        if n >= 4 * _ALIGN:
            row_tile = min(row_tile, -(-n // 4))
        row_tile = max(_ALIGN, (row_tile // _ALIGN) * _ALIGN)

    row_tile = int(row_tile)
    if row_tile >= n:
        row_tile = n                       # full-extent block: always layout-legal
    else:
        row_tile = max(8, (row_tile // 8) * 8)

    num_tiles = pl.cdiv(n, row_tile)
    tgt2d = targets.astype(jnp.int32).reshape(n, 1)   # tiny; big inputs untouched

    kernel = functools.partial(_knn_focal_kernel, gamma=float(coeff),
                               total_n=n, row_tile=row_tile)

    in_bytes = (jnp.dtype(pred_logits.dtype).itemsize +
                jnp.dtype(knn_logits.dtype).itemsize)
    cost = pl.CostEstimate(
        flops=10 * n * c,
        transcendentals=n * c + 3 * n,
        bytes_accessed=n * c * in_bytes + n * 4 + num_tiles * 128 * 4,
    )

    partials = pl.pallas_call(
        kernel,
        out_shape=jax.ShapeDtypeStruct((num_tiles, 1, 128), jnp.float32),
        grid=(num_tiles,),
        in_specs=[
            pl.BlockSpec((row_tile, c), lambda i: (i, 0)),   # pred logits
            pl.BlockSpec((row_tile, c), lambda i: (i, 0)),   # knn logits
            pl.BlockSpec((row_tile, 1), lambda i: (i, 0)),   # int32 targets
        ],
        out_specs=pl.BlockSpec((1, 1, 128), lambda i: (i, 0, 0)),
        compiler_params=pltpu.CompilerParams(
            dimension_semantics=("parallel",),               # megacore on v7x
            vmem_limit_bytes=vmem_limit,
        ),
        cost_estimate=cost,
    )(pred_logits, knn_logits, tgt2d)

    # Tiny final reduce over per-tile partial sums (negligible XLA op).
    return jnp.sum(partials[:, 0, 0]) / jnp.float32(n)


def _reference(pred_logits, knn_logits, targets, coeff):
    """Pure-JAX reference mirroring the PyTorch module."""
    n, c = pred_logits.shape
    logp = jax.nn.log_softmax(pred_logits.astype(jnp.float32), axis=-1)
    ce = -jnp.take_along_axis(logp, targets[:, None], axis=-1)[:, 0]
    onehot = jax.nn.one_hot(targets, c, dtype=jnp.float32)
    knn = knn_logits.astype(jnp.float32)
    p = knn / jnp.sum(knn, -1, keepdims=True)
    p_t = jnp.sum(p * onehot, -1)
    modulator = jnp.exp(coeff * jnp.log1p(-p_t))
    return jnp.sum(ce * modulator) / n


if __name__ == "__main__":
    key = jax.random.PRNGKey(0)
    k1, k2, k3 = jax.random.split(key, 3)

    N, C = 37, 32          # small demo; N deliberately not 8-aligned
    gamma = 2.0

    pred_logits = jax.random.normal(k1, (N, C), dtype=jnp.float32)
    # kNN logits are non-negative scores (counts / probabilities) per class.
    knn_logits = jax.random.uniform(k2, (N, C), dtype=jnp.float32,
                                    minval=0.1, maxval=1.0)
    targets = jax.random.randint(k3, (N,), 0, C, dtype=jnp.int32)

    ref = _reference(pred_logits, knn_logits, targets, gamma)

    # Default (auto) tiling: single full-extent block (no ragged edge).
    loss = knn_focal_like_loss(pred_logits, knn_logits, targets, gamma)
    loss = jax.block_until_ready(loss)
    np.testing.assert_allclose(np.asarray(loss), np.asarray(ref),
                               rtol=1e-5, atol=1e-5)

    # Forced small tile: exercises the multi-tile "parallel" path with a
    # ragged last block (37 = 32 + 5) and the in-kernel validity mask.
    loss_small = knn_focal_like_loss(pred_logits, knn_logits, targets, gamma,
                                     row_tile=32)
    loss_small = jax.block_until_ready(loss_small)
    np.testing.assert_allclose(np.asarray(loss_small), np.asarray(ref),
                               rtol=1e-5, atol=1e-5)

    print("KERNEL_OK")
</pallas_src>

<mosaic_0001>
module attributes {stable_mosaic.version = 11 : i64} {
  func.func @_knn_focal_kernel(%arg0: i32, %arg1: memref<37x32xf32, #tpu.memory_space<vmem>>, %arg2: memref<37x32xf32, #tpu.memory_space<vmem>>, %arg3: memref<37x1xi32, #tpu.memory_space<vmem>>, %arg4: memref<1x1x128xf32, #tpu.memory_space<vmem>>) attributes {dimension_semantics = [#tpu.dimension_semantics<parallel>], iteration_bounds = array<i64: 1>, scalar_prefetch = 0 : i64, scratch_operands = 0 : i64, tpu.core_type = #tpu.core_type<tc>, window_params = [{transform_indices = @transform_0, window_bounds = array<i64: 37, 32>}, {transform_indices = @transform_1, window_bounds = array<i64: 37, 32>}, {transform_indices = @transform_2, window_bounds = array<i64: 37, 1>}, {transform_indices = @transform_3, window_bounds = array<i64: 1, 1, 128>}]} {
    %c0 = arith.constant 0 : index
    %c0_0 = arith.constant 0 : index
    %0 = vector.load %arg1[%c0, %c0_0] : memref<37x32xf32, #tpu.memory_space<vmem>>, vector<37x32xf32>
    %c0_1 = arith.constant 0 : index
    %c0_2 = arith.constant 0 : index
    %1 = vector.load %arg2[%c0_1, %c0_2] : memref<37x32xf32, #tpu.memory_space<vmem>>, vector<37x32xf32>
    %c0_3 = arith.constant 0 : index
    %c0_4 = arith.constant 0 : index
    %2 = vector.load %arg3[%c0_3, %c0_4] : memref<37x1xi32, #tpu.memory_space<vmem>>, vector<37x1xi32>
    %c37_i32 = arith.constant 37 : i32
    %3 = arith.muli %arg0, %c37_i32 : i32
    %4 = tpu.iota {dimensions = array<i32: 0>} : vector<37x1xi32>
    %5 = vector.broadcast %3 : i32 to vector<37x1xi32>
    %6 = arith.addi %5, %4 : vector<37x1xi32>
    %c37_i32_5 = arith.constant 37 : i32
    %7 = vector.broadcast %c37_i32_5 : i32 to vector<37x1xi32>
    %8 = arith.cmpi slt, %6, %7 : vector<37x1xi32>
    %9 = tpu.iota {dimensions = array<i32: 1>} : vector<37x32xi32>
    %10 = vector.broadcast %2 : vector<37x1xi32> to vector<37x32xi32>
    %11 = arith.cmpi eq, %9, %10 : vector<37x32xi32>
    %cst = arith.constant dense<0xFF800000> : vector<37xf32>
    %12 = vector.multi_reduction <maximumf>, %0, %cst [1] : vector<37x32xf32> to vector<37xf32>
    %13 = vector.shape_cast %12 : vector<37xf32> to vector<37x1xf32>
    %14 = vector.broadcast %13 : vector<37x1xf32> to vector<37x32xf32>
    %15 = arith.subf %0, %14 : vector<37x32xf32>
    %16 = math.exp %15 : vector<37x32xf32>
    %cst_6 = arith.constant dense<0.000000e+00> : vector<37xf32>
    %17 = vector.multi_reduction <add>, %16, %cst_6 [1] : vector<37x32xf32> to vector<37xf32>
    %18 = vector.shape_cast %17 : vector<37xf32> to vector<37x1xf32>
    %19 = math.log %18 : vector<37x1xf32>
    %20 = arith.addf %19, %13 : vector<37x1xf32>
    %cst_7 = arith.constant 0.000000e+00 : f32
    %21 = vector.broadcast %cst_7 : f32 to vector<37x32xf32>
    %22 = arith.select %11, %0, %21 : vector<37x32xi1>, vector<37x32xf32>
    %cst_8 = arith.constant dense<0.000000e+00> : vector<37xf32>
    %23 = vector.multi_reduction <add>, %22, %cst_8 [1] : vector<37x32xf32> to vector<37xf32>
    %24 = vector.shape_cast %23 : vector<37xf32> to vector<37x1xf32>
    %25 = arith.subf %20, %24 : vector<37x1xf32>
    %cst_9 = arith.constant dense<0.000000e+00> : vector<37xf32>
    %26 = vector.multi_reduction <add>, %1, %cst_9 [1] : vector<37x32xf32> to vector<37xf32>
    %27 = vector.shape_cast %26 : vector<37xf32> to vector<37x1xf32>
    %cst_10 = arith.constant 1.000000e+00 : f32
    %28 = vector.broadcast %cst_10 : f32 to vector<37x1xf32>
    %29 = arith.select %8, %27, %28 : vector<37x1xi1>, vector<37x1xf32>
    %cst_11 = arith.constant 0.000000e+00 : f32
    %30 = vector.broadcast %cst_11 : f32 to vector<37x32xf32>
    %31 = arith.select %11, %1, %30 : vector<37x32xi1>, vector<37x32xf32>
    %cst_12 = arith.constant dense<0.000000e+00> : vector<37xf32>
    %32 = vector.multi_reduction <add>, %31, %cst_12 [1] : vector<37x32xf32> to vector<37xf32>
    %33 = vector.shape_cast %32 : vector<37xf32> to vector<37x1xf32>
    %34 = arith.divf %33, %29 : vector<37x1xf32>
    %cst_13 = arith.constant 0.000000e+00 : f32
    %35 = vector.broadcast %cst_13 : f32 to vector<37x1xf32>
    %36 = arith.subf %35, %34 : vector<37x1xf32>
    %37 = math.log1p %36 : vector<37x1xf32>
    %cst_14 = arith.constant 2.000000e+00 : f32
    %38 = vector.broadcast %cst_14 : f32 to vector<37x1xf32>
    %39 = arith.mulf %38, %37 : vector<37x1xf32>
    %40 = math.exp %39 : vector<37x1xf32>
    %41 = arith.mulf %25, %40 : vector<37x1xf32>
    %cst_15 = arith.constant 0.000000e+00 : f32
    %42 = vector.broadcast %cst_15 : f32 to vector<37x1xf32>
    %43 = arith.select %8, %41, %42 : vector<37x1xi1>, vector<37x1xf32>
    %cst_16 = arith.constant dense<0.000000e+00> : vector<1xf32>
    %44 = vector.multi_reduction <add>, %43, %cst_16 [0] : vector<37x1xf32> to vector<1xf32>
    %45 = vector.shape_cast %44 : vector<1xf32> to vector<1x1xf32>
    %46 = vector.shape_cast %45 : vector<1x1xf32> to vector<1x1x1xf32>
    %47 = vector.shape_cast %46 : vector<1x1x1xf32> to vector<1x1x1xf32>
    %48 = vector.broadcast %47 : vector<1x1x1xf32> to vector<1x1x128xf32>
    %c0_17 = arith.constant 0 : index
    %c0_18 = arith.constant 0 : index
    %c0_19 = arith.constant 0 : index
    %49 = vector.load %arg4[%c0_17, %c0_18, %c0_19] : memref<1x1x128xf32, #tpu.memory_space<vmem>>, vector<1x1x128xf32>
    tpu.vector_store %arg4[%c0_17, %c0_18, %c0_19], %48 {strides = array<i32>} : memref<1x1x128xf32, #tpu.memory_space<vmem>>, vector<1x1x128xf32>,
    return
  }
  func.func @transform_0(%arg0: i32) -> (i32, i32) {
    %c0_i32 = arith.constant 0 : i32
    %c0_i32_0 = arith.constant 0 : i32
    return %arg0, %c0_i32 : i32, i32
  }
  func.func @transform_1(%arg0: i32) -> (i32, i32) {
    %c0_i32 = arith.constant 0 : i32
    %c0_i32_0 = arith.constant 0 : i32
    return %arg0, %c0_i32 : i32, i32
  }
  func.func @transform_2(%arg0: i32) -> (i32, i32) {
    %c0_i32 = arith.constant 0 : i32
    %c0_i32_0 = arith.constant 0 : i32
    return %arg0, %c0_i32 : i32, i32
  }
  func.func @transform_3(%arg0: i32) -> (i32, i32, i32) {
    %c0_i32 = arith.constant 0 : i32
    %c0_i32_0 = arith.constant 0 : i32
    %c0_i32_1 = arith.constant 0 : i32
    return %arg0, %c0_i32, %c0_i32_0 : i32, i32, i32
  }
}

</mosaic_0001>

<llo_original>
// kernel: tpu_custom_call.1
$region0: #{tpu_custom_call.1}
  #allocation0 [shape = 'u32[]', space=smem, size = 0x4, offset = 0x4, fixed_abs, tag = 'smem constant byte address 0x4 - core index']
  #allocation1 [shape = 'u32[144,128]{1,0:T(1,128)}', space=vmem, size = 0x12000, scoped, tag = 'internal scratch']
  %s0 = inlined_call_operand.vmem [shape: f32[37,32], index: 0, kind: input, shape index: {}]
  %s1 = inlined_call_operand.vmem [shape: f32[37,32], index: 1, kind: input, shape index: {}]
  %s2 = inlined_call_operand.vmem [shape: s32[37,1], index: 2, kind: input, shape index: {}]
  %s3 = inlined_call_operand.hbm [shape: f32[1,1,128], index: 3, kind: output, shape index: {}]
  %s4 = sld [smem:[#allocation0]]
  $region22: #{tpu_custom_call.1} parent=0
    _
  %s6 = ssub.s32 1, %s4
  %s7 = scalar_select 0, %s6, %s4
  $region1: #{tpu_custom_call.1} parent=0
    #allocation2 [shape = 'u8[512]{0}', space=vmem, size = 0x400, scoped, tag = 'output window, operand 0, single buffered']
    #allocation3 [shape = 's32[1]{0}', space=sflag, size = 0x4, scoped, tag = 'scoped memory for tpu_custom_call.1']
    %8 = vsyncpa [#allocation3], 0
    // Predicated region
    $region2: #{tpu_custom_call.1} parent=1 // pred_check
      _
    $region3: #{tpu_custom_call.1} parent=1 // pred_check_branch
      %10 = sbr.rel (0) target = $region5
    $region4: #{tpu_custom_call.1} parent=1 // pred_region
      _
    $region5: #{tpu_custom_call.1} parent=1 // pred_fallthru
      _
    // Predicated region
    $region6: #{tpu_custom_call.1} parent=1 // pred_check
      _
    $region7: #{tpu_custom_call.1} parent=1 // pred_check_branch
      %12 = sbr.rel (0) target = $region9
    $region8: #{tpu_custom_call.1} parent=1 // pred_region
      _
    $region9: #{tpu_custom_call.1} parent=1 // pred_fallthru
      _
    // Predicated region
    $region10: #{tpu_custom_call.1} parent=1 // pred_check
      _
    $region11: #{tpu_custom_call.1} parent=1 // pred_check_branch
      %14 = sbr.rel (0) target = $region13
    $region12: #{tpu_custom_call.1} parent=1 // pred_region
      _
    $region13: #{tpu_custom_call.1} parent=1 // pred_fallthru
      _
    %v15 = vld [vmem:[%s0] sm:$0xff]
    %v16 = vld [vmem:[%s0 + $0x8] sm:$0xff]
    %v17 = vld [vmem:[%s0 + $0x10] sm:$0xff]
    %v18 = vld [vmem:[%s0 + $0x18] sm:$0xff]
    %v19 = vld [vmem:[%s0 + $0x20] sm:$0x1f]
    %v20 = vld [vmem:[%s1] sm:$0xff]
    %v21 = vld [vmem:[%s1 + $0x8] sm:$0xff]
    %v22 = vld [vmem:[%s1 + $0x10] sm:$0xff]
    %v23 = vld [vmem:[%s1 + $0x18] sm:$0xff]
    %v24 = vld [vmem:[%s1 + $0x20] sm:$0x1f]
    %v25 = vld [vmem:[%s2] sm:$0xff]
    %v26 = vld [vmem:[%s2 + $0x8] sm:$0xff]
    %v27 = vld [vmem:[%s2 + $0x10] sm:$0xff]
    %v28 = vld [vmem:[%s2 + $0x18] sm:$0xff]
    %v29 = vld [vmem:[%s2 + $0x20] sm:$0x1f]
    %s30 = smul.u32 0, 37
    %v31 = vlaneseq
    %v32 = vshrl.u32 %v31, 7
    %v33 = vadd.s32 %v32, 8
    %v34 = vadd.s32 %v32, 16
    %v35 = vadd.s32 %v32, 24
    %v36 = vadd.s32 %v32, 32
    %v37 = vstv %s30
    %v38 = vadd.s32 %v37, %v32
    %v39 = vadd.s32 %v37, %v33
    %v40 = vadd.s32 %v37, %v34
    %v41 = vadd.s32 %v37, %v35
    %v42 = vadd.s32 %v37, %v36
    %vm43 = vcmp.lt.s32.totalorder %v38, 37
    %vm44 = vcmp.lt.s32.totalorder %v39, 37
    %vm45 = vcmp.lt.s32.totalorder %v40, 37
    %vm46 = vcmp.lt.s32.totalorder %v41, 37
    %vm47 = vcmp.lt.s32.totalorder %v42, 37
    %v48 = vlaneseq
    %v49 = vand.u32 %v48, 127
    %50 = vset.pattern.permute.xlu0 0
    %51 = vperm.xlu0 %50, %v25
    %v52 = vpop.permute.xlu0 %51
    %53 = vset.pattern.permute.xlu0 0
    %54 = vperm.xlu0 %53, %v26
    %v55 = vpop.permute.xlu0 %54
    %56 = vset.pattern.permute.xlu0 0
    %57 = vperm.xlu0 %56, %v27
    %v58 = vpop.permute.xlu0 %57
    %59 = vset.pattern.permute.xlu0 0
    %60 = vperm.xlu0 %59, %v28
    %v61 = vpop.permute.xlu0 %60
    %62 = vset.pattern.permute.xlu0 0
    %63 = vperm.xlu0 %62, %v29
    %v64 = vpop.permute.xlu0 %63
    %vm65 = vcmp.eq.s32.totalorder %v49, %v52
    %vm66 = vcmp.eq.s32.totalorder %v49, %v55
    %vm67 = vcmp.eq.s32.totalorder %v49, %v58
    %vm68 = vcmp.eq.s32.totalorder %v49, %v61
    %vm69 = vcmp.eq.s32.totalorder %v49, %v64
    %vm70 = vcmask 261120
    %v71 = vsel %vm70, %v15, -inf
    %72 = vmax.xlane.f32.xlu0 %v71
    %v73 = vpop.xlane.xlu0 %72
    %v74 = vsel %vm70, %v16, -inf
    %75 = vmax.xlane.f32.xlu0 %v74
    %v76 = vpop.xlane.xlu0 %75
    %v77 = vsel %vm70, %v17, -inf
    %78 = vmax.xlane.f32.xlu0 %v77
    %v79 = vpop.xlane.xlu0 %78
    %v80 = vsel %vm70, %v18, -inf
    %81 = vmax.xlane.f32.xlu0 %v80
    %v82 = vpop.xlane.xlu0 %81
    %vm83 = vcmask 258048
    %v84 = vsel %vm83, %v19, -inf
    %85 = vmax.xlane.f32.xlu0 %v84
    %v86 = vpop.xlane.xlu0 %85
    %v87 = vsub.f32 %v15, %v73
    %v88 = vsub.f32 %v16, %v76
    %v89 = vsub.f32 %v17, %v79
    %v90 = vsub.f32 %v18, %v82
    %v91 = vsub.f32 %v19, %v86
    %v92 = vmul.f32 %v87, 1.442695
    %v93 = vpow.pop %v92
    %v94 = vmul.f32 %v88, 1.442695
    %v95 = vpow.pop %v94
    %v96 = vmul.f32 %v89, 1.442695
    %v97 = vpow.pop %v96
    %v98 = vmul.f32 %v90, 1.442695
    %v99 = vpow.pop %v98
    %v100 = vmul.f32 %v91, 1.442695
    %v101 = vpow.pop %v100
    %v102 = vsel %vm70, %v93, 0.0
    %103 = vadd.xlane.f32.xlu0 %v102
    %v104 = vpop.xlane.xlu0 %103
    %v105 = vsel %vm70, %v95, 0.0
    %106 = vadd.xlane.f32.xlu0 %v105
    %v107 = vpop.xlane.xlu0 %106
    %v108 = vsel %vm70, %v97, 0.0
    %109 = vadd.xlane.f32.xlu0 %v108
    %v110 = vpop.xlane.xlu0 %109
    %v111 = vsel %vm70, %v99, 0.0
    %112 = vadd.xlane.f32.xlu0 %v111
    %v113 = vpop.xlane.xlu0 %112
    %v114 = vsel %vm83, %v101, 0.0
    %115 = vadd.xlane.f32.xlu0 %v114
    %v116 = vpop.xlane.xlu0 %115
    %v117 = vlog2.pop %v104
    %v118 = vmul.f32 %v117, 0.6931472
    %v119 = vlog2.pop %v107
    %v120 = vmul.f32 %v119, 0.6931472
    %v121 = vlog2.pop %v110
    %v122 = vmul.f32 %v121, 0.6931472
    %v123 = vlog2.pop %v113
    %v124 = vmul.f32 %v123, 0.6931472
    %v125 = vlog2.pop %v116
    %v126 = vmul.f32 %v125, 0.6931472
    %v127 = vadd.f32 %v118, %v73
    %v128 = vadd.f32 %v120, %v76
    %v129 = vadd.f32 %v122, %v79
    %v130 = vadd.f32 %v124, %v82
    %v131 = vadd.f32 %v126, %v86
    %v132 = vsel %vm65, %v15, 0.0
    %v133 = vsel %vm66, %v16, 0.0
    %v134 = vsel %vm67, %v17, 0.0
    %v135 = vsel %vm68, %v18, 0.0
    %v136 = vsel %vm69, %v19, 0.0
    %v137 = vsel %vm70, %v132, 0.0
    %138 = vadd.xlane.f32.xlu0 %v137
    %v139 = vpop.xlane.xlu0 %138
    %v140 = vsel %vm70, %v133, 0.0
    %141 = vadd.xlane.f32.xlu0 %v140
    %v142 = vpop.xlane.xlu0 %141
    %v143 = vsel %vm70, %v134, 0.0
    %144 = vadd.xlane.f32.xlu0 %v143
    %v145 = vpop.xlane.xlu0 %144
    %v146 = vsel %vm70, %v135, 0.0
    %147 = vadd.xlane.f32.xlu0 %v146
    %v148 = vpop.xlane.xlu0 %147
    %v149 = vsel %vm83, %v136, 0.0
    %150 = vadd.xlane.f32.xlu0 %v149
    %v151 = vpop.xlane.xlu0 %150
    %v152 = vsub.f32 %v127, %v139
    %v153 = vsub.f32 %v128, %v142
    %v154 = vsub.f32 %v129, %v145
    %v155 = vsub.f32 %v130, %v148
    %v156 = vsub.f32 %v131, %v151
    %v157 = vsel %vm70, %v20, 0.0
    %158 = vadd.xlane.f32.xlu0 %v157
    %v159 = vpop.xlane.xlu0 %158
    %v160 = vsel %vm70, %v21, 0.0
    %161 = vadd.xlane.f32.xlu0 %v160
    %v162 = vpop.xlane.xlu0 %161
    %v163 = vsel %vm70, %v22, 0.0
    %164 = vadd.xlane.f32.xlu0 %v163
    %v165 = vpop.xlane.xlu0 %164
    %v166 = vsel %vm70, %v23, 0.0
    %167 = vadd.xlane.f32.xlu0 %v166
    %v168 = vpop.xlane.xlu0 %167
    %v169 = vsel %vm83, %v24, 0.0
    %170 = vadd.xlane.f32.xlu0 %v169
    %v171 = vpop.xlane.xlu0 %170
    %v172 = vsel %vm43, %v159, 1.0
    %v173 = vsel %vm44, %v162, 1.0
    %v174 = vsel %vm45, %v165, 1.0
    %v175 = vsel %vm46, %v168, 1.0
    %v176 = vsel %vm47, %v171, 1.0
    %v177 = vsel %vm65, %v20, 0.0
    %v178 = vsel %vm66, %v21, 0.0
    %v179 = vsel %vm67, %v22, 0.0
    %v180 = vsel %vm68, %v23, 0.0
    %v181 = vsel %vm69, %v24, 0.0
    %v182 = vsel %vm70, %v177, 0.0
    %183 = vadd.xlane.f32.xlu0 %v182
    %v184 = vpop.xlane.xlu0 %183
    %v185 = vsel %vm70, %v178, 0.0
    %186 = vadd.xlane.f32.xlu0 %v185
    %v187 = vpop.xlane.xlu0 %186
    %v188 = vsel %vm70, %v179, 0.0
    %189 = vadd.xlane.f32.xlu0 %v188
    %v190 = vpop.xlane.xlu0 %189
    %v191 = vsel %vm70, %v180, 0.0
    %192 = vadd.xlane.f32.xlu0 %v191
    %v193 = vpop.xlane.xlu0 %192
    %v194 = vsel %vm83, %v181, 0.0
    %195 = vadd.xlane.f32.xlu0 %v194
    %v196 = vpop.xlane.xlu0 %195
    %v197 = vrcp.pop %v172
    %v198 = vmul.f32 %v184, %v197
    %v199 = vrcp.pop %v173
    %v200 = vmul.f32 %v187, %v199
    %v201 = vrcp.pop %v174
    %v202 = vmul.f32 %v190, %v201
    %v203 = vrcp.pop %v175
    %v204 = vmul.f32 %v193, %v203
    %v205 = vrcp.pop %v176
    %v206 = vmul.f32 %v196, %v205
    %v207 = vsub.f32 0.0, %v198
    %v208 = vsub.f32 0.0, %v200
    %v209 = vsub.f32 0.0, %v202
    %v210 = vsub.f32 0.0, %v204
    %v211 = vsub.f32 0.0, %v206
    %v212 = vadd.f32 %v207, 1.0
    %v213 = vlog2.pop %v212
    %v214 = vmul.f32 %v213, 0.6931472
    %v215 = vmul.f32 -0.5, %v207
    %v216 = vadd.f32 %v215, 1.0
    %v217 = vmul.f32 %v216, %v207
    %v218 = vand.u32 2147483647, %v207
    %vm219 = vcmp.lt.f32.partialorder %v218, 0.0004427343
    %v220 = vsel %vm219, %v217, %v214
    %v221 = vadd.f32 %v208, 1.0
    %v222 = vlog2.pop %v221
    %v223 = vmul.f32 %v222, 0.6931472
    %v224 = vmul.f32 -0.5, %v208
    %v225 = vadd.f32 %v224, 1.0
    %v226 = vmul.f32 %v225, %v208
    %v227 = vand.u32 2147483647, %v208
    %vm228 = vcmp.lt.f32.partialorder %v227, 0.0004427343
    %v229 = vsel %vm228, %v226, %v223
    %v230 = vadd.f32 %v209, 1.0
    %v231 = vlog2.pop %v230
    %v232 = vmul.f32 %v231, 0.6931472
    %v233 = vmul.f32 -0.5, %v209
    %v234 = vadd.f32 %v233, 1.0
    %v235 = vmul.f32 %v234, %v209
    %v236 = vand.u32 2147483647, %v209
    %vm237 = vcmp.lt.f32.partialorder %v236, 0.0004427343
    %v238 = vsel %vm237, %v235, %v232
    %v239 = vadd.f32 %v210, 1.0
    %v240 = vlog2.pop %v239
    %v241 = vmul.f32 %v240, 0.6931472
    %v242 = vmul.f32 -0.5, %v210
    %v243 = vadd.f32 %v242, 1.0
    %v244 = vmul.f32 %v243, %v210
    %v245 = vand.u32 2147483647, %v210
    %vm246 = vcmp.lt.f32.partialorder %v245, 0.0004427343
    %v247 = vsel %vm246, %v244, %v241
    %v248 = vadd.f32 %v211, 1.0
    %v249 = vlog2.pop %v248
    %v250 = vmul.f32 %v249, 0.6931472
    %v251 = vmul.f32 -0.5, %v211
    %v252 = vadd.f32 %v251, 1.0
    %v253 = vmul.f32 %v252, %v211
    %v254 = vand.u32 2147483647, %v211
    %vm255 = vcmp.lt.f32.partialorder %v254, 0.0004427343
    %v256 = vsel %vm255, %v253, %v250
    %v257 = vmul.f32 %v220, 2.0
    %v258 = vmul.f32 %v229, 2.0
    %v259 = vmul.f32 %v238, 2.0
    %v260 = vmul.f32 %v247, 2.0
    %v261 = vmul.f32 %v256, 2.0
    %v262 = vmul.f32 %v257, 1.442695
    %v263 = vpow.pop %v262
    %v264 = vmul.f32 %v258, 1.442695
    %v265 = vpow.pop %v264
    %v266 = vmul.f32 %v259, 1.442695
    %v267 = vpow.pop %v266
    %v268 = vmul.f32 %v260, 1.442695
    %v269 = vpow.pop %v268
    %v270 = vmul.f32 %v261, 1.442695
    %v271 = vpow.pop %v270
    %v272 = vmul.f32 %v152, %v263
    %v273 = vmul.f32 %v153, %v265
    %v274 = vmul.f32 %v154, %v267
    %v275 = vmul.f32 %v155, %v269
    %v276 = vmul.f32 %v156, %v271
    %v277 = vsel %vm43, %v272, 0.0
    %v278 = vsel %vm44, %v273, 0.0
    %v279 = vsel %vm45, %v274, 0.0
    %v280 = vsel %vm46, %v275, 0.0
    %v281 = vsel %vm47, %v276, 0.0
    %v282 = vadd.f32 %v277, %v278
    %v283 = vadd.f32 %v282, %v279
    %v284 = vadd.f32 %v283, %v280
    %vm285 = vcmask 1044480
    %v286 = vsel %vm285, %v281, 0.0
    %v287 = vadd.f32 %v284, %v286
    %v288 = vrot.slane %v287, 4
    %v289 = vadd.f32 %v287, %v288
    %v290 = vrot.slane %v289, 2
    %v291 = vadd.f32 %v289, %v290
    %v292 = vrot.slane %v291, 1
    %v293 = vadd.f32 %v291, %v292
    %294 = vst [vmem:[#allocation2] sm:$0x1] %v293
    // Predicated region
    $region14: #{tpu_custom_call.1} parent=1 // pred_check
      _
    $region15: #{tpu_custom_call.1} parent=1 // pred_check_branch
      %296 = sbr.rel (0) target = $region17
    $region16: #{tpu_custom_call.1} parent=1 // pred_region
      %s298 = ssub.s32 16, 16
      %299 = vsyncadd [#allocation3], %s298
      %s301 = sshll.u32 [#allocation2], 4
      %s302 = int_to_ptr.vmem [resolvable:$true] %s301
      %304 = dma.vmem_to_hbm [thread:$0]  %s302, 16, %s3, [#allocation3]
    $region17: #{tpu_custom_call.1} parent=1 // pred_fallthru
      _
    // Predicated region
    $region18: #{tpu_custom_call.1} parent=1 // pred_check
      _
    $region19: #{tpu_custom_call.1} parent=1 // pred_check_branch
      %306 = sbr.rel (0) target = $region21
    $region20: #{tpu_custom_call.1} parent=1 // pred_region
      %307 = dma.done [#allocation3], 16
    $region21: #{tpu_custom_call.1} parent=1 // pred_fallthru
      _
    %308 = vsyncpa [#allocation3], 1

</llo_original>
